<compile_context>
chip_gen: v7x
topology: tpu7x:2x2x1
jax: 0.10.0
libtpu: 0.0.40
codegen_flags: <defaults>
</compile_context>

<pallas_src>
import functools

import numpy as np
import jax
import jax.numpy as jnp
from jax.experimental import pallas as pl
from jax.experimental.pallas import tpu as pltpu

INTERNAL = 64      # self.internal_size in the PyTorch module
_LANES = 128       # TPU lane width; packed weights padded to 128 output cols
_SUB = 8           # sublane quantum

# ---------------------------------------------------------------------------
# Parameter packing: one [rows, 128] slab, sliced with static offsets in-kernel
# ---------------------------------------------------------------------------
_PACK_ORDER = ("W1", "W2", "KI", "V", "R1", "R2", "O")


def pack_params(params):
    """Pack the 7 (weight, bias) pairs used by forward() into one f32 slab.

    Returns (slab [R, 128], offsets {name: (w_row, in_rows, b_row)}).
    Weight/bias columns beyond out_features are zero, so matmuls against the
    padded slab are exact; callers slice the needed output columns.
    """
    blocks, offsets, row = [], {}, 0
    for name in _PACK_ORDER:
        w = jnp.asarray(params[f"{name}_w"], jnp.float32)            # [in, out]
        b = jnp.asarray(params[f"{name}_b"], jnp.float32).reshape(1, -1)
        rin, rout = w.shape
        assert rout <= _LANES, f"{name}: out_features {rout} > {_LANES} unsupported"
        rpad = pl.cdiv(rin, _SUB) * _SUB
        wp = jnp.zeros((rpad, _LANES), jnp.float32).at[:rin, :rout].set(w)
        bp = jnp.zeros((_SUB, _LANES), jnp.float32).at[:1, :rout].set(b)
        offsets[name] = (row, rin, row + rpad)
        blocks += [wp, bp]
        row += rpad + _SUB
    return jnp.concatenate(blocks, axis=0), offsets


# ---------------------------------------------------------------------------
# Kernel: one batch tile per grid step (write then read)
# ---------------------------------------------------------------------------
def _kv_memory_kernel(x_ref, q_ref, k_ref, v_ref, p_ref,
                      out_ref, nk_ref, nv_ref, *, offsets):
    f32 = jnp.float32
    Bt, M, Ke = k_ref.shape
    Ve = v_ref.shape[-1]
    Out = out_ref.shape[-1]

    x = x_ref[...].astype(f32)           # [Bt, In]
    qv = q_ref[...].astype(f32)          # [Bt, Q]
    keys = k_ref[...].astype(f32)        # [Bt, M, Ke]
    vals = v_ref[...].astype(f32)        # [Bt, M, Ve]

    def lin(a, name):
        w_row, in_rows, b_row = offsets[name]
        w = p_ref[w_row:w_row + in_rows, :].astype(f32)   # [in, 128] (zero-padded cols)
        b = p_ref[b_row:b_row + 1, :].astype(f32)         # [1, 128]
        return jnp.dot(a, w, preferred_element_type=f32) + b

    # ---------------- write(input, (keys, vals)) ----------------
    wi = lin(x, "W1")                                      # [Bt, 128]
    wk = lin(keys.reshape(Bt * M, Ke), "W2")               # [Bt*M, 128]
    wk = wk.reshape(Bt, M, _LANES)                         # [Bt, M, 128]
    # attention over memory slots; padded columns (>= 64) are zero on both sides
    scores = jnp.sum(wi[:, None, :] * wk, axis=-1, keepdims=True)   # [Bt, M, 1]
    w = jax.nn.softmax(scores, axis=1)                               # softmax over M

    k_emb = lin(x, "KI")[:, :Ke]                           # [Bt, Ke]
    v_emb = lin(x, "V")[:, :Ve]                            # [Bt, Ve]
    new_keys = keys + w * k_emb[:, None, :]                # [Bt, M, Ke]
    new_vals = vals + w * v_emb[:, None, :]                # [Bt, M, Ve]

    # ---------------- read(query, new memory) --------------------
    rq = lin(qv, "R1")                                     # [Bt, 128]
    rm = lin(new_keys.reshape(Bt * M, Ke), "R2").reshape(Bt, M, _LANES)
    rsc = jnp.sum(rq[:, None, :] * rm, axis=-1, keepdims=True)       # [Bt, M, 1]
    p = jax.nn.softmax(rsc, axis=1)                                   # softmax over M
    read = jnp.sum(p * new_vals, axis=1)                   # [Bt, Ve]
    y = lin(read, "O")[:, :Out]                            # [Bt, Out]

    out_ref[...] = y.astype(out_ref.dtype)
    nk_ref[...] = new_keys.astype(nk_ref.dtype)
    nv_ref[...] = new_vals.astype(nv_ref.dtype)


# ---------------------------------------------------------------------------
# Wrapper
# ---------------------------------------------------------------------------
def kv_memory_forward(x, q, keys, vals, params, *, block_b=64):
    """Batched KVMemory forward.

    x: [B, 1, In], q: [B, 1, Q], keys: [B, M, Ke], vals: [B, M, Ve].
    Returns (output [B, Out], (new_keys, new_vals)).
    """
    B, _, In = x.shape
    Q = q.shape[-1]
    M, Ke = keys.shape[1], keys.shape[2]
    Ve = vals.shape[-1]
    Out = params["O_w"].shape[1]

    slab, offsets = pack_params(params)

    # Batch tile: whole batch if small, else a sublane-aligned (multiple-of-8) tile.
    Bt = B if B <= block_b else max(_SUB, (block_b // _SUB) * _SUB)
    Bp = pl.cdiv(B, Bt) * Bt
    pad = Bp - B

    x2 = x.reshape(B, In)
    q2 = q.reshape(B, Q)
    kp, vp = keys, vals
    if pad:  # pad ragged batch; padded rows are harmless (softmax of zeros) and sliced off
        x2 = jnp.pad(x2, ((0, pad), (0, 0)))
        q2 = jnp.pad(q2, ((0, pad), (0, 0)))
        kp = jnp.pad(keys, ((0, pad), (0, 0), (0, 0)))
        vp = jnp.pad(vals, ((0, pad), (0, 0), (0, 0)))

    grid = (Bp // Bt,)
    in_specs = [
        pl.BlockSpec((Bt, In), lambda b: (b, 0)),          # input
        pl.BlockSpec((Bt, Q), lambda b: (b, 0)),           # query
        pl.BlockSpec((Bt, M, Ke), lambda b: (b, 0, 0)),    # keys
        pl.BlockSpec((Bt, M, Ve), lambda b: (b, 0, 0)),    # vals
        pl.BlockSpec(slab.shape, lambda b: (0, 0)),        # packed params (fetched once)
    ]
    out_specs = (
        pl.BlockSpec((Bt, Out), lambda b: (b, 0)),
        pl.BlockSpec((Bt, M, Ke), lambda b: (b, 0, 0)),
        pl.BlockSpec((Bt, M, Ve), lambda b: (b, 0, 0)),
    )
    out_shape = (
        jax.ShapeDtypeStruct((Bp, Out), x.dtype),
        jax.ShapeDtypeStruct((Bp, M, Ke), kp.dtype),
        jax.ShapeDtypeStruct((Bp, M, Ve), vp.dtype),
    )

    # Advisory cost hint (the kernel is HBM/overhead bound, not compute bound).
    flops = (2 * Bp * _LANES * (3 * In + Q + Ve)
             + 2 * Bp * M * (2 * Ke * _LANES + 2 * _LANES + Ke + Ve))
    bytes_accessed = int(
        sum(a.size * a.dtype.itemsize for a in (x2, q2, kp, vp, slab))
        + Bp * Out * x.dtype.itemsize
        + kp.size * kp.dtype.itemsize + vp.size * vp.dtype.itemsize)
    cost = pl.CostEstimate(flops=int(flops), transcendentals=int(2 * Bp * M),
                           bytes_accessed=bytes_accessed)

    fn = pl.pallas_call(
        functools.partial(_kv_memory_kernel, offsets=offsets),
        out_shape=out_shape,
        grid=grid,
        in_specs=in_specs,
        out_specs=out_specs,
        # keys -> new_keys, vals -> new_vals updated in place (no 2nd HBM slab).
        input_output_aliases={2: 1, 3: 2},
        compiler_params=pltpu.CompilerParams(
            dimension_semantics=("parallel",),
            vmem_limit_bytes=64 * 1024 * 1024),
        cost_estimate=cost,
    )
    out, nk, nv = fn(x2, q2, kp, vp, slab)
    return out[:B], (nk[:B], nv[:B])


# ---------------------------------------------------------------------------
# Pure-JAX reference (mirrors the PyTorch forward: write then read)
# ---------------------------------------------------------------------------
def kv_memory_ref(x, q, keys, vals, params):
    def lin(a, w, b):
        return a @ w + b
    # write
    Wi = lin(x, params["W1_w"], params["W1_b"])        # [B,1,64]
    Wk = lin(keys, params["W2_w"], params["W2_b"])     # [B,M,64]
    mul = jnp.einsum("bif,bmf->bim", Wi, Wk)           # [B,1,M]
    w = jax.nn.softmax(mul, axis=2)
    k_emb = lin(x, params["KI_w"], params["KI_b"])     # [B,1,Ke]
    v_emb = lin(x, params["V_w"], params["V_b"])       # [B,1,Ve]
    wT = jnp.swapaxes(w, 1, 2)                         # [B,M,1]
    new_keys = keys + wT * k_emb
    new_vals = vals + wT * v_emb
    # read
    Rq = lin(q, params["R1_w"], params["R1_b"])
    Rm = lin(new_keys, params["R2_w"], params["R2_b"])
    p = jax.nn.softmax(jnp.einsum("bif,bmf->bim", Rq, Rm), axis=2)
    out = jnp.sum(jnp.swapaxes(p, 1, 2) * new_vals, axis=1)   # [B,Ve]
    return out @ params["O_w"] + params["O_b"], (new_keys, new_vals)


def init_params(key, input_size, query_size, key_embed, val_embed, output_size):
    """Deterministic synthetic weights (Linear -> [in, out] weight, [1, out] bias)."""
    shapes = {
        "KI": (input_size, key_embed),
        "V":  (input_size, val_embed),
        "W1": (input_size, INTERNAL),
        "W2": (key_embed, INTERNAL),
        "R1": (query_size, INTERNAL),
        "R2": (key_embed, INTERNAL),
        "O":  (val_embed, output_size),
    }
    # TODO(synk): VI / F1 / F2 (used only by forget(), never by forward()) are omitted.
    params = {}
    for name, shp in shapes.items():
        key, kw, kb = jax.random.split(key, 3)
        params[f"{name}_w"] = (0.1 * jax.random.normal(kw, shp)).astype(jnp.float32)
        params[f"{name}_b"] = (0.1 * jax.random.normal(kb, (1, shp[1]))).astype(jnp.float32)
    return params


if __name__ == "__main__":
    B = 2
    input_size, query_size = 32, 16
    key_embed, val_embed = 24, 40
    output_size, memory_size = 8, 16

    root = jax.random.PRNGKey(0)
    kp, kx, kq, kk, kv = jax.random.split(root, 5)

    params = init_params(kp, input_size, query_size, key_embed, val_embed, output_size)
    x = jax.random.normal(kx, (B, 1, input_size), dtype=jnp.float32)
    q = jax.random.normal(kq, (B, 1, query_size), dtype=jnp.float32)
    keys = jax.random.normal(kk, (B, memory_size, key_embed), dtype=jnp.float32)
    vals = jax.random.normal(kv, (B, memory_size, val_embed), dtype=jnp.float32)

    fwd = jax.jit(kv_memory_forward)
    out, (new_keys, new_vals) = fwd(x, q, keys, vals, params)
    jax.block_until_ready((out, new_keys, new_vals))

    ref_out, (ref_keys, ref_vals) = kv_memory_ref(x, q, keys, vals, params)
    np.testing.assert_allclose(np.asarray(out), np.asarray(ref_out), rtol=1e-4, atol=1e-4)
    np.testing.assert_allclose(np.asarray(new_keys), np.asarray(ref_keys), rtol=1e-4, atol=1e-4)
    np.testing.assert_allclose(np.asarray(new_vals), np.asarray(ref_vals), rtol=1e-4, atol=1e-4)

    print("KERNEL_OK")
</pallas_src>

<mosaic_0001>
module attributes {stable_mosaic.version = 11 : i64} {
  func.func @_kv_memory_kernel(%arg0: i32, %arg1: memref<2x32xf32, #tpu.memory_space<vmem>>, %arg2: memref<2x16xf32, #tpu.memory_space<vmem>>, %arg3: memref<2x16x24xf32, #tpu.memory_space<vmem>>, %arg4: memref<2x16x40xf32, #tpu.memory_space<vmem>>, %arg5: memref<256x128xf32, #tpu.memory_space<vmem>>, %arg6: memref<2x8xf32, #tpu.memory_space<vmem>>, %arg7: memref<2x16x24xf32, #tpu.memory_space<vmem>>, %arg8: memref<2x16x40xf32, #tpu.memory_space<vmem>>) attributes {dimension_semantics = [#tpu.dimension_semantics<parallel>], iteration_bounds = array<i64: 1>, scalar_prefetch = 0 : i64, scratch_operands = 0 : i64, tpu.core_type = #tpu.core_type<tc>, window_params = [{transform_indices = @transform_0, window_bounds = array<i64: 2, 32>}, {transform_indices = @transform_1, window_bounds = array<i64: 2, 16>}, {transform_indices = @transform_2, window_bounds = array<i64: 2, 16, 24>}, {transform_indices = @transform_3, window_bounds = array<i64: 2, 16, 40>}, {pipeline_mode = #tpu.pipeline_mode<synchronous>, transform_indices = @transform_4, window_bounds = array<i64: 256, 128>}, {transform_indices = @transform_5, window_bounds = array<i64: 2, 8>}, {transform_indices = @transform_6, window_bounds = array<i64: 2, 16, 24>}, {transform_indices = @transform_7, window_bounds = array<i64: 2, 16, 40>}]} {
    %c0 = arith.constant 0 : index
    %c0_0 = arith.constant 0 : index
    %0 = vector.load %arg1[%c0, %c0_0] : memref<2x32xf32, #tpu.memory_space<vmem>>, vector<2x32xf32>
    %c0_1 = arith.constant 0 : index
    %c0_2 = arith.constant 0 : index
    %1 = vector.load %arg2[%c0_1, %c0_2] : memref<2x16xf32, #tpu.memory_space<vmem>>, vector<2x16xf32>
    %c0_3 = arith.constant 0 : index
    %c0_4 = arith.constant 0 : index
    %c0_5 = arith.constant 0 : index
    %2 = vector.load %arg3[%c0_3, %c0_4, %c0_5] : memref<2x16x24xf32, #tpu.memory_space<vmem>>, vector<2x16x24xf32>
    %c0_6 = arith.constant 0 : index
    %c0_7 = arith.constant 0 : index
    %c0_8 = arith.constant 0 : index
    %3 = vector.load %arg4[%c0_6, %c0_7, %c0_8] : memref<2x16x40xf32, #tpu.memory_space<vmem>>, vector<2x16x40xf32>
    %c0_9 = arith.constant 0 : index
    %c0_10 = arith.constant 0 : index
    %4 = vector.load %arg5[%c0_9, %c0_10] : memref<256x128xf32, #tpu.memory_space<vmem>>, vector<32x128xf32>
    %c32 = arith.constant 32 : index
    %c0_11 = arith.constant 0 : index
    %5 = vector.load %arg5[%c32, %c0_11] : memref<256x128xf32, #tpu.memory_space<vmem>>, vector<1x128xf32>
    %cst = arith.constant dense<0.000000e+00> : vector<2x128xf32>
    %6 = tpu.matmul %0, %4, %cst {dimension_numbers = #tpu.dot_dimension_numbers<[1], [0], [0], [1], [0, 0, 1, 1], [], []>} : vector<2x32xf32>, vector<32x128xf32>, vector<2x128xf32> -> vector<2x128xf32>
    %7 = vector.broadcast %5 : vector<1x128xf32> to vector<2x128xf32>
    %8 = arith.addf %6, %7 : vector<2x128xf32>
    %9 = vector.shape_cast %2 : vector<2x16x24xf32> to vector<32x24xf32>
    %c40 = arith.constant 40 : index
    %c0_12 = arith.constant 0 : index
    %10 = vector.load %arg5[%c40, %c0_12] : memref<256x128xf32, #tpu.memory_space<vmem>>, vector<24x128xf32>
    %c64 = arith.constant 64 : index
    %c0_13 = arith.constant 0 : index
    %11 = vector.load %arg5[%c64, %c0_13] : memref<256x128xf32, #tpu.memory_space<vmem>>, vector<1x128xf32>
    %cst_14 = arith.constant dense<0.000000e+00> : vector<32x128xf32>
    %12 = tpu.matmul %9, %10, %cst_14 {dimension_numbers = #tpu.dot_dimension_numbers<[1], [0], [0], [1], [0, 0, 1, 1], [], []>} : vector<32x24xf32>, vector<24x128xf32>, vector<32x128xf32> -> vector<32x128xf32>
    %13 = vector.broadcast %11 : vector<1x128xf32> to vector<32x128xf32>
    %14 = arith.addf %12, %13 : vector<32x128xf32>
    %15 = vector.shape_cast %14 : vector<32x128xf32> to vector<2x16x128xf32>
    %16 = vector.shape_cast %8 : vector<2x128xf32> to vector<2x1x128xf32>
    %17 = vector.broadcast %16 : vector<2x1x128xf32> to vector<2x16x128xf32>
    %18 = arith.mulf %17, %15 : vector<2x16x128xf32>
    %cst_15 = arith.constant dense<0.000000e+00> : vector<2x16xf32>
    %19 = vector.multi_reduction <add>, %18, %cst_15 [2] : vector<2x16x128xf32> to vector<2x16xf32>
    %20 = vector.shape_cast %19 : vector<2x16xf32> to vector<2x16x1xf32>
    %cst_16 = arith.constant dense<0xFF800000> : vector<2x1xf32>
    %21 = vector.multi_reduction <maximumf>, %20, %cst_16 [1] : vector<2x16x1xf32> to vector<2x1xf32>
    %cst_17 = arith.constant 0xFF800000 : f32
    %22 = vector.broadcast %cst_17 : f32 to vector<2x1xf32>
    %23 = arith.maximumf %22, %21 : vector<2x1xf32>
    %24 = vector.shape_cast %23 : vector<2x1xf32> to vector<2x1x1xf32>
    %25 = vector.broadcast %24 : vector<2x1x1xf32> to vector<2x16x1xf32>
    %26 = arith.subf %20, %25 : vector<2x16x1xf32>
    %27 = math.exp %26 : vector<2x16x1xf32>
    %cst_18 = arith.constant dense<0.000000e+00> : vector<2x1xf32>
    %28 = vector.multi_reduction <add>, %27, %cst_18 [1] : vector<2x16x1xf32> to vector<2x1xf32>
    %29 = vector.shape_cast %28 : vector<2x1xf32> to vector<2x1x1xf32>
    %30 = vector.broadcast %29 : vector<2x1x1xf32> to vector<2x16x1xf32>
    %31 = arith.divf %27, %30 : vector<2x16x1xf32>
    %c72 = arith.constant 72 : index
    %c0_19 = arith.constant 0 : index
    %32 = vector.load %arg5[%c72, %c0_19] : memref<256x128xf32, #tpu.memory_space<vmem>>, vector<32x128xf32>
    %c104 = arith.constant 104 : index
    %c0_20 = arith.constant 0 : index
    %33 = vector.load %arg5[%c104, %c0_20] : memref<256x128xf32, #tpu.memory_space<vmem>>, vector<1x128xf32>
    %cst_21 = arith.constant dense<0.000000e+00> : vector<2x128xf32>
    %34 = tpu.matmul %0, %32, %cst_21 {dimension_numbers = #tpu.dot_dimension_numbers<[1], [0], [0], [1], [0, 0, 1, 1], [], []>} : vector<2x32xf32>, vector<32x128xf32>, vector<2x128xf32> -> vector<2x128xf32>
    %35 = vector.broadcast %33 : vector<1x128xf32> to vector<2x128xf32>
    %36 = arith.addf %34, %35 : vector<2x128xf32>
    %37 = vector.extract_strided_slice %36 {offsets = [0, 0], sizes = [2, 24], strides = [1, 1]} : vector<2x128xf32> to vector<2x24xf32>
    %c112 = arith.constant 112 : index
    %c0_22 = arith.constant 0 : index
    %38 = vector.load %arg5[%c112, %c0_22] : memref<256x128xf32, #tpu.memory_space<vmem>>, vector<32x128xf32>
    %c144 = arith.constant 144 : index
    %c0_23 = arith.constant 0 : index
    %39 = vector.load %arg5[%c144, %c0_23] : memref<256x128xf32, #tpu.memory_space<vmem>>, vector<1x128xf32>
    %cst_24 = arith.constant dense<0.000000e+00> : vector<2x128xf32>
    %40 = tpu.matmul %0, %38, %cst_24 {dimension_numbers = #tpu.dot_dimension_numbers<[1], [0], [0], [1], [0, 0, 1, 1], [], []>} : vector<2x32xf32>, vector<32x128xf32>, vector<2x128xf32> -> vector<2x128xf32>
    %41 = vector.broadcast %39 : vector<1x128xf32> to vector<2x128xf32>
    %42 = arith.addf %40, %41 : vector<2x128xf32>
    %43 = vector.extract_strided_slice %42 {offsets = [0, 0], sizes = [2, 40], strides = [1, 1]} : vector<2x128xf32> to vector<2x40xf32>
    %44 = vector.shape_cast %37 : vector<2x24xf32> to vector<2x1x24xf32>
    %45 = vector.broadcast %31 : vector<2x16x1xf32> to vector<2x16x24xf32>
    %46 = vector.broadcast %44 : vector<2x1x24xf32> to vector<2x16x24xf32>
    %47 = arith.mulf %45, %46 : vector<2x16x24xf32>
    %48 = arith.addf %2, %47 : vector<2x16x24xf32>
    %49 = vector.shape_cast %43 : vector<2x40xf32> to vector<2x1x40xf32>
    %50 = vector.broadcast %31 : vector<2x16x1xf32> to vector<2x16x40xf32>
    %51 = vector.broadcast %49 : vector<2x1x40xf32> to vector<2x16x40xf32>
    %52 = arith.mulf %50, %51 : vector<2x16x40xf32>
    %53 = arith.addf %3, %52 : vector<2x16x40xf32>
    %c152 = arith.constant 152 : index
    %c0_25 = arith.constant 0 : index
    %54 = vector.load %arg5[%c152, %c0_25] : memref<256x128xf32, #tpu.memory_space<vmem>>, vector<16x128xf32>
    %c168 = arith.constant 168 : index
    %c0_26 = arith.constant 0 : index
    %55 = vector.load %arg5[%c168, %c0_26] : memref<256x128xf32, #tpu.memory_space<vmem>>, vector<1x128xf32>
    %cst_27 = arith.constant dense<0.000000e+00> : vector<2x128xf32>
    %56 = tpu.matmul %1, %54, %cst_27 {dimension_numbers = #tpu.dot_dimension_numbers<[1], [0], [0], [1], [0, 0, 1, 1], [], []>} : vector<2x16xf32>, vector<16x128xf32>, vector<2x128xf32> -> vector<2x128xf32>
    %57 = vector.broadcast %55 : vector<1x128xf32> to vector<2x128xf32>
    %58 = arith.addf %56, %57 : vector<2x128xf32>
    %59 = vector.shape_cast %48 : vector<2x16x24xf32> to vector<32x24xf32>
    %c176 = arith.constant 176 : index
    %c0_28 = arith.constant 0 : index
    %60 = vector.load %arg5[%c176, %c0_28] : memref<256x128xf32, #tpu.memory_space<vmem>>, vector<24x128xf32>
    %c200 = arith.constant 200 : index
    %c0_29 = arith.constant 0 : index
    %61 = vector.load %arg5[%c200, %c0_29] : memref<256x128xf32, #tpu.memory_space<vmem>>, vector<1x128xf32>
    %cst_30 = arith.constant dense<0.000000e+00> : vector<32x128xf32>
    %62 = tpu.matmul %59, %60, %cst_30 {dimension_numbers = #tpu.dot_dimension_numbers<[1], [0], [0], [1], [0, 0, 1, 1], [], []>} : vector<32x24xf32>, vector<24x128xf32>, vector<32x128xf32> -> vector<32x128xf32>
    %63 = vector.broadcast %61 : vector<1x128xf32> to vector<32x128xf32>
    %64 = arith.addf %62, %63 : vector<32x128xf32>
    %65 = vector.shape_cast %64 : vector<32x128xf32> to vector<2x16x128xf32>
    %66 = vector.shape_cast %58 : vector<2x128xf32> to vector<2x1x128xf32>
    %67 = vector.broadcast %66 : vector<2x1x128xf32> to vector<2x16x128xf32>
    %68 = arith.mulf %67, %65 : vector<2x16x128xf32>
    %cst_31 = arith.constant dense<0.000000e+00> : vector<2x16xf32>
    %69 = vector.multi_reduction <add>, %68, %cst_31 [2] : vector<2x16x128xf32> to vector<2x16xf32>
    %70 = vector.shape_cast %69 : vector<2x16xf32> to vector<2x16x1xf32>
    %cst_32 = arith.constant dense<0xFF800000> : vector<2x1xf32>
    %71 = vector.multi_reduction <maximumf>, %70, %cst_32 [1] : vector<2x16x1xf32> to vector<2x1xf32>
    %cst_33 = arith.constant 0xFF800000 : f32
    %72 = vector.broadcast %cst_33 : f32 to vector<2x1xf32>
    %73 = arith.maximumf %72, %71 : vector<2x1xf32>
    %74 = vector.shape_cast %73 : vector<2x1xf32> to vector<2x1x1xf32>
    %75 = vector.broadcast %74 : vector<2x1x1xf32> to vector<2x16x1xf32>
    %76 = arith.subf %70, %75 : vector<2x16x1xf32>
    %77 = math.exp %76 : vector<2x16x1xf32>
    %cst_34 = arith.constant dense<0.000000e+00> : vector<2x1xf32>
    %78 = vector.multi_reduction <add>, %77, %cst_34 [1] : vector<2x16x1xf32> to vector<2x1xf32>
    %79 = vector.shape_cast %78 : vector<2x1xf32> to vector<2x1x1xf32>
    %80 = vector.broadcast %79 : vector<2x1x1xf32> to vector<2x16x1xf32>
    %81 = arith.divf %77, %80 : vector<2x16x1xf32>
    %82 = vector.broadcast %81 : vector<2x16x1xf32> to vector<2x16x40xf32>
    %83 = arith.mulf %82, %53 : vector<2x16x40xf32>
    %cst_35 = arith.constant dense<0.000000e+00> : vector<2x40xf32>
    %84 = vector.multi_reduction <add>, %83, %cst_35 [1] : vector<2x16x40xf32> to vector<2x40xf32>
    %c208 = arith.constant 208 : index
    %c0_36 = arith.constant 0 : index
    %85 = vector.load %arg5[%c208, %c0_36] : memref<256x128xf32, #tpu.memory_space<vmem>>, vector<40x128xf32>
    %c248 = arith.constant 248 : index
    %c0_37 = arith.constant 0 : index
    %86 = vector.load %arg5[%c248, %c0_37] : memref<256x128xf32, #tpu.memory_space<vmem>>, vector<1x128xf32>
    %cst_38 = arith.constant dense<0.000000e+00> : vector<2x128xf32>
    %87 = tpu.matmul %84, %85, %cst_38 {dimension_numbers = #tpu.dot_dimension_numbers<[1], [0], [0], [1], [0, 0, 1, 1], [], []>} : vector<2x40xf32>, vector<40x128xf32>, vector<2x128xf32> -> vector<2x128xf32>
    %88 = vector.broadcast %86 : vector<1x128xf32> to vector<2x128xf32>
    %89 = arith.addf %87, %88 : vector<2x128xf32>
    %90 = vector.extract_strided_slice %89 {offsets = [0, 0], sizes = [2, 8], strides = [1, 1]} : vector<2x128xf32> to vector<2x8xf32>
    %c0_39 = arith.constant 0 : index
    %c0_40 = arith.constant 0 : index
    %91 = vector.load %arg6[%c0_39, %c0_40] : memref<2x8xf32, #tpu.memory_space<vmem>>, vector<2x8xf32>
    tpu.vector_store %arg6[%c0_39, %c0_40], %90 {strides = array<i32>} : memref<2x8xf32, #tpu.memory_space<vmem>>, vector<2x8xf32>,
    %c0_41 = arith.constant 0 : index
    %c0_42 = arith.constant 0 : index
    %c0_43 = arith.constant 0 : index
    %92 = vector.load %arg7[%c0_41, %c0_42, %c0_43] : memref<2x16x24xf32, #tpu.memory_space<vmem>>, vector<2x16x24xf32>
    tpu.vector_store %arg7[%c0_41, %c0_42, %c0_43], %48 {strides = array<i32>} : memref<2x16x24xf32, #tpu.memory_space<vmem>>, vector<2x16x24xf32>,
    %c0_44 = arith.constant 0 : index
    %c0_45 = arith.constant 0 : index
    %c0_46 = arith.constant 0 : index
    %93 = vector.load %arg8[%c0_44, %c0_45, %c0_46] : memref<2x16x40xf32, #tpu.memory_space<vmem>>, vector<2x16x40xf32>
    tpu.vector_store %arg8[%c0_44, %c0_45, %c0_46], %53 {strides = array<i32>} : memref<2x16x40xf32, #tpu.memory_space<vmem>>, vector<2x16x40xf32>,
    return
  }
  func.func @transform_0(%arg0: i32) -> (i32, i32) {
    %c0_i32 = arith.constant 0 : i32
    %c0_i32_0 = arith.constant 0 : i32
    return %arg0, %c0_i32 : i32, i32
  }
  func.func @transform_1(%arg0: i32) -> (i32, i32) {
    %c0_i32 = arith.constant 0 : i32
    %c0_i32_0 = arith.constant 0 : i32
    return %arg0, %c0_i32 : i32, i32
  }
  func.func @transform_2(%arg0: i32) -> (i32, i32, i32) {
    %c0_i32 = arith.constant 0 : i32
    %c0_i32_0 = arith.constant 0 : i32
    %c0_i32_1 = arith.constant 0 : i32
    return %arg0, %c0_i32, %c0_i32_0 : i32, i32, i32
  }
  func.func @transform_3(%arg0: i32) -> (i32, i32, i32) {
    %c0_i32 = arith.constant 0 : i32
    %c0_i32_0 = arith.constant 0 : i32
    %c0_i32_1 = arith.constant 0 : i32
    return %arg0, %c0_i32, %c0_i32_0 : i32, i32, i32
  }
  func.func @transform_4(%arg0: i32) -> (i32, i32) {
    %c0_i32 = arith.constant 0 : i32
    %c0_i32_0 = arith.constant 0 : i32
    %c0_i32_1 = arith.constant 0 : i32
    return %c0_i32, %c0_i32_0 : i32, i32
  }
  func.func @transform_5(%arg0: i32) -> (i32, i32) {
    %c0_i32 = arith.constant 0 : i32
    %c0_i32_0 = arith.constant 0 : i32
    return %arg0, %c0_i32 : i32, i32
  }
  func.func @transform_6(%arg0: i32) -> (i32, i32, i32) {
    %c0_i32 = arith.constant 0 : i32
    %c0_i32_0 = arith.constant 0 : i32
    %c0_i32_1 = arith.constant 0 : i32
    return %arg0, %c0_i32, %c0_i32_0 : i32, i32, i32
  }
  func.func @transform_7(%arg0: i32) -> (i32, i32, i32) {
    %c0_i32 = arith.constant 0 : i32
    %c0_i32_0 = arith.constant 0 : i32
    %c0_i32_1 = arith.constant 0 : i32
    return %arg0, %c0_i32, %c0_i32_0 : i32, i32, i32
  }
}

</mosaic_0001>

<llo_original>
// kernel: kv_memory_forward.1
$region0: #{kv_memory_forward.1}
  #allocation0 [shape = 'u32[]', space=smem, size = 0x4, offset = 0x4, fixed_abs, tag = 'smem constant byte address 0x4 - core index']
  #allocation1 [shape = 'u32[144,128]{1,0:T(1,128)}', space=vmem, size = 0x12000, scoped, tag = 'internal scratch']
  %s0 = inlined_call_operand.hbm [shape: f32[2,32], index: 0, kind: input, shape index: {}]
  %s1 = inlined_call_operand.hbm [shape: f32[2,16], index: 1, kind: input, shape index: {}]
  %s2 = inlined_call_operand.hbm [shape: f32[2,16,24], index: 2, kind: input, shape index: {}, may-alias: {2,6}]
  %s3 = inlined_call_operand.hbm [shape: f32[2,16,40], index: 3, kind: input, shape index: {}, may-alias: {3,7}]
  %s4 = inlined_call_operand.hbm [shape: f32[256,128], index: 4, kind: input, shape index: {}]
  %s5 = inlined_call_operand.hbm [shape: f32[2,8], index: 5, kind: output, shape index: {0}]
  %s6 = inlined_call_operand.hbm [shape: f32[2,16,24], index: 6, kind: output, shape index: {1}, may-alias: {2,6}]
  %s7 = inlined_call_operand.hbm [shape: f32[2,16,40], index: 7, kind: output, shape index: {2}, may-alias: {3,7}]
  %8 = xla_tuple %s5, %s6, %s7
  %s9 = sld [smem:[#allocation0]]
  $region66: #{kv_memory_forward.1} parent=0
    _
  %s11 = ssub.s32 1, %s9
  %s12 = scalar_select 0, %s11, %s9
  $region1: #{kv_memory_forward.1} parent=0
    #allocation2 [shape = 'u8[1024]{0}', space=vmem, size = 0x400, scoped, tag = 'input window, operand 0, single buffered']
    #allocation3 [shape = 's32[1]{0}', space=sflag, size = 0x4, scoped, tag = 'scoped memory for kv_memory_forward.1']
    #allocation4 [shape = 's32[1]{0}', space=sflag, size = 0x4, scoped, tag = 'scoped memory for kv_memory_forward.1']
    #allocation5 [shape = 'u8[1024]{0}', space=vmem, size = 0x400, scoped, tag = 'input window, operand 1, single buffered']
    #allocation6 [shape = 's32[1]{0}', space=sflag, size = 0x4, scoped, tag = 'scoped memory for kv_memory_forward.1']
    #allocation7 [shape = 'u8[16384]{0}', space=vmem, size = 0x4000, scoped, tag = 'input window, operand 2, single buffered']
    #allocation8 [shape = 'u8[16384]{0}', space=vmem, size = 0x4000, scoped, tag = 'input window, operand 3, single buffered']
    #allocation9 [shape = 's32[1]{0}', space=sflag, size = 0x4, scoped, tag = 'scoped memory for kv_memory_forward.1']
    #allocation10 [shape = 'u8[131072]{0}', space=vmem, size = 0x20000, scoped, tag = 'input window, operand 4, single buffered']
    #allocation11 [shape = 'u8[1024]{0}', space=vmem, size = 0x400, scoped, tag = 'output window, operand 0, single buffered']
    #allocation12 [shape = 'u8[16384]{0}', space=vmem, size = 0x4000, scoped, tag = 'output window, operand 1, single buffered']
    #allocation13 [shape = 's32[1]{0}', space=sflag, size = 0x4, scoped, tag = 'scoped memory for kv_memory_forward.1']
    #allocation14 [shape = 'u8[16384]{0}', space=vmem, size = 0x4000, scoped, tag = 'output window, operand 2, single buffered']
    %13 = vsyncpa [#allocation3], 0
    %14 = vsyncpa [#allocation6], 0
    %15 = vsyncpa [#allocation9], 0
    %16 = vsyncpa [#allocation4], 0
    %17 = vsyncpa [#allocation13], 0
    // Predicated region
    $region2: #{kv_memory_forward.1} parent=1 // pred_check
      _
    $region3: #{kv_memory_forward.1} parent=1 // pred_check_branch
      %19 = sbr.rel (0) target = $region5
    $region4: #{kv_memory_forward.1} parent=1 // pred_region
      %s21 = ssub.s32 32, 32
      %22 = vsyncadd [#allocation3], %s21
      %s24 = sshll.u32 [#allocation2], 4
      %s25 = int_to_ptr.vmem [resolvable:$true] %s24
      %27 = dma.hbm_to_vmem [thread:$0]  %s0, 32, %s25, [#allocation3]
    $region5: #{kv_memory_forward.1} parent=1 // pred_fallthru
      _
    // Predicated region
    $region6: #{kv_memory_forward.1} parent=1 // pred_check
      _
    $region7: #{kv_memory_forward.1} parent=1 // pred_check_branch
      %29 = sbr.rel (0) target = $region9
    $region8: #{kv_memory_forward.1} parent=1 // pred_region
      %s31 = ssub.s32 32, 32
      %32 = vsyncadd [#allocation6], %s31
      %s34 = sshll.u32 [#allocation5], 4
      %s35 = int_to_ptr.vmem [resolvable:$true] %s34
      %37 = dma.hbm_to_vmem [thread:$0]  %s1, 32, %s35, [#allocation6]
    $region9: #{kv_memory_forward.1} parent=1 // pred_fallthru
      _
    // Predicated region
    $region10: #{kv_memory_forward.1} parent=1 // pred_check
      _
    $region11: #{kv_memory_forward.1} parent=1 // pred_check_branch
      %39 = sbr.rel (0) target = $region13
    $region12: #{kv_memory_forward.1} parent=1 // pred_region
      %s41 = ssub.s32 512, 512
      %42 = vsyncadd [#allocation6], %s41
      %s43 = sshll.u32 [#allocation7], 4
      %s44 = int_to_ptr.vmem [resolvable:$true] %s43
      %49 = dma.hbm_to_vmem [thread:$0]  %s2, 512, %s44, [#allocation6], 128, 128, 8
    $region13: #{kv_memory_forward.1} parent=1 // pred_fallthru
      _
    // Predicated region
    $region14: #{kv_memory_forward.1} parent=1 // pred_check
      _
    $region15: #{kv_memory_forward.1} parent=1 // pred_check_branch
      %51 = sbr.rel (0) target = $region17
    $region16: #{kv_memory_forward.1} parent=1 // pred_region
      %s53 = ssub.s32 512, 512
      %54 = vsyncadd [#allocation9], %s53
      %s55 = sshll.u32 [#allocation8], 4
      %s56 = int_to_ptr.vmem [resolvable:$true] %s55
      %61 = dma.hbm_to_vmem [thread:$0]  %s3, 512, %s56, [#allocation9], 128, 128, 8
    $region17: #{kv_memory_forward.1} parent=1 // pred_fallthru
      _
    // Predicated region
    $region18: #{kv_memory_forward.1} parent=1 // pred_check
      _
    $region19: #{kv_memory_forward.1} parent=1 // pred_check_branch
      %63 = sbr.rel (0) target = $region21
    $region20: #{kv_memory_forward.1} parent=1 // pred_region
      %s65 = ssub.s32 4096, 4096
      %66 = vsyncadd [#allocation9], %s65
      %s67 = sshll.u32 [#allocation10], 4
      %s68 = int_to_ptr.vmem [resolvable:$true] %s67
      %73 = dma.hbm_to_vmem [thread:$0]  %s4, 4096, %s68, [#allocation9], 128, 128, 8
    $region21: #{kv_memory_forward.1} parent=1 // pred_fallthru
      _
    // Predicated region
    $region22: #{kv_memory_forward.1} parent=1 // pred_check
      _
    $region23: #{kv_memory_forward.1} parent=1 // pred_check_branch
      %75 = sbr.rel (0) target = $region25
    $region24: #{kv_memory_forward.1} parent=1 // pred_region
      %76 = dma.done [#allocation3], 32
    $region25: #{kv_memory_forward.1} parent=1 // pred_fallthru
      _
    // Predicated region
    $region26: #{kv_memory_forward.1} parent=1 // pred_check
      _
    $region27: #{kv_memory_forward.1} parent=1 // pred_check_branch
      %78 = sbr.rel (0) target = $region29
    $region28: #{kv_memory_forward.1} parent=1 // pred_region
      %79 = dma.done [#allocation6], 32
    $region29: #{kv_memory_forward.1} parent=1 // pred_fallthru
      _
    // Predicated region
    $region30: #{kv_memory_forward.1} parent=1 // pred_check
      _
    $region31: #{kv_memory_forward.1} parent=1 // pred_check_branch
      %81 = sbr.rel (0) target = $region33
    $region32: #{kv_memory_forward.1} parent=1 // pred_region
      %82 = dma.done [#allocation6], 512
    $region33: #{kv_memory_forward.1} parent=1 // pred_fallthru
      _
    // Predicated region
    $region34: #{kv_memory_forward.1} parent=1 // pred_check
      _
    $region35: #{kv_memory_forward.1} parent=1 // pred_check_branch
      %84 = sbr.rel (0) target = $region37
    $region36: #{kv_memory_forward.1} parent=1 // pred_region
      %85 = dma.done [#allocation9], 512
    $region37: #{kv_memory_forward.1} parent=1 // pred_fallthru
      _
    // Predicated region
    $region38: #{kv_memory_forward.1} parent=1 // pred_check
      _
    $region39: #{kv_memory_forward.1} parent=1 // pred_check_branch
      %87 = sbr.rel (0) target = $region41
    $region40: #{kv_memory_forward.1} parent=1 // pred_region
      %88 = dma.done [#allocation9], 4096
    $region41: #{kv_memory_forward.1} parent=1 // pred_fallthru
      _
    %v89 = vld [vmem:[#allocation2] sm:$0x3]
    %v90 = vld [vmem:[#allocation5] sm:$0x3]
    %v91 = vld [vmem:[#allocation7] sm:$0xff]
    %v92 = vld [vmem:[#allocation7 + $0x8] sm:$0xff]
    %v93 = vld [vmem:[#allocation7 + $0x10] sm:$0xff]
    %v94 = vld [vmem:[#allocation7 + $0x18] sm:$0xff]
    %v95 = vld [vmem:[#allocation8] sm:$0xff]
    %v96 = vld [vmem:[#allocation8 + $0x8] sm:$0xff]
    %v97 = vld [vmem:[#allocation8 + $0x10] sm:$0xff]
    %v98 = vld [vmem:[#allocation8 + $0x18] sm:$0xff]
    %v99 = vld [vmem:[#allocation10] sm:$0xff]
    %v100 = vld [vmem:[#allocation10 + $0x8] sm:$0xff]
    %v101 = vld [vmem:[#allocation10 + $0x10] sm:$0xff]
    %v102 = vld [vmem:[#allocation10 + $0x18] sm:$0xff]
    %v103 = vld [vmem:[#allocation10 + $0x20] sm:$0x1]
    %v104 = vlaneseq
    %v105 = vshrl.u32 %v104, 7
    %v106 = vsub.s32 0, %v105
    %v107 = vrot.slane %v103, %v106
    %vm108 = vcmask 261120
    %v110 = vsel %vm108, %v89, 0
    %112 = vmatprep.subr.mxu0 0.0
    %113 = vmatpush1.msra.mxu0 %v99
    %114 = vmatprep.subr.mxu0 0.0
    %115 = vmatpush1.msra.mxu0 %v100
    %116 = vmatprep.subr.mxu0 0.0
    %117 = vmatpush1.msra.mxu0 %v101
    %118 = vmatprep.subr.mxu0 0.0
    %119 = vmatpush1.msra.mxu0 %v102
    %120 = vmatprep.subr.mxu0 0.0
    %121 = vmatpush1.msra.mxu0 0.0
    %122 = vmatprep.subr.mxu0 0.0
    %123 = vmatpush1.msra.mxu0 0.0
    %124 = vmatprep.subr.mxu0 0.0
    %125 = vmatpush1.msra.mxu0 0.0
    %126 = vmatprep.subr.mxu0 0.0
    %127 = vmatpush1.msra.mxu0 0.0
    %128 = vmatprep.subr.mxu0 0.0
    %129 = vmatpush1.msra.mxu0 0.0
    %130 = vmatprep.subr.mxu0 0.0
    %131 = vmatpush1.msra.mxu0 0.0
    %132 = vmatprep.subr.mxu0 0.0
    %133 = vmatpush1.msra.mxu0 0.0
    %134 = vmatprep.subr.mxu0 0.0
    %135 = vmatpush1.msra.mxu0 0.0
    %136 = vmatprep.subr.mxu0 0.0
    %137 = vmatpush1.msra.mxu0 0.0
    %138 = vmatprep.subr.mxu0 0.0
    %139 = vmatpush1.msra.mxu0 0.0
    %140 = vmatprep.subr.mxu0 0.0
    %141 = vmatpush1.msra.mxu0 0.0
    %142 = vmatprep.subr.mxu0 0.0
    %143 = vmatpush1.msra.mxu0 0.0
    %144 = vmatprep.subr.mxu0 0.0
    %145 = vmatpush1.msra.mxu0 0.0
    %146 = vmatprep.subr.mxu0 0.0
    %147 = vmatpush1.msra.mxu0 0.0
    %148 = vmatprep.subr.mxu0 0.0
    %149 = vmatpush1.msra.mxu0 0.0
    %150 = vmatprep.subr.mxu0 0.0
    %151 = vmatpush1.msra.mxu0 0.0
    %152 = vmatprep.subr.mxu0 0.0
    %153 = vmatpush1.msra.mxu0 0.0
    %154 = vmatprep.subr.mxu0 0.0
    %155 = vmatpush1.msra.mxu0 0.0
    %156 = vmatprep.subr.mxu0 0.0
    %157 = vmatpush1.msra.mxu0 0.0
    %158 = vmatprep.subr.mxu0 0.0
    %159 = vmatpush1.msra.mxu0 0.0
    %160 = vmatprep.subr.mxu0 0.0
    %161 = vmatpush1.msra.mxu0 0.0
    %162 = vmatprep.subr.mxu0 0.0
    %163 = vmatpush1.msra.mxu0 0.0
    %164 = vmatprep.subr.mxu0 0.0
    %165 = vmatpush1.msra.mxu0 0.0
    %166 = vmatprep.subr.mxu0 0.0
    %167 = vmatpush1.msra.mxu0 0.0
    %168 = vmatprep.subr.mxu0 0.0
    %169 = vmatpush1.msra.mxu0 0.0
    %170 = vmatprep.subr.mxu0 0.0
    %171 = vmatpush1.msra.mxu0 0.0
    %172 = vmatprep.subr.mxu0 0.0
    %173 = vmatpush1.msra.mxu0 0.0
    %174 = vmatprep.subr.mxu0 0.0
    %175 = vmatpush1.msra.mxu0 0.0
    %176 = vmatprep.mubr.f32.mxu0 0.0
    %177 = vmatmul.mubr.f32.gmra.mrb[0].mxu0 %v110
    %v178 = vpop.f32.mrb[0].mxu0
    %v179 = vadd.f32 %v107, %v178
    %v180 = vpop.f32.mrb[0].mxu0
    %181 = vdwg.mxu0
    %v182 = vld [vmem:[#allocation10 + $0x28] sm:$0xff]
    %v183 = vld [vmem:[#allocation10 + $0x30] sm:$0xff]
    %v184 = vld [vmem:[#allocation10 + $0x38] sm:$0xff]
    %v185 = vld [vmem:[#allocation10 + $0x40] sm:$0x1]
    %v186 = vlaneseq
    %v187 = vshrl.u32 %v186, 7
    %v188 = vsub.s32 0, %v187
    %v189 = vrot.slane %v185, %v188
    %vm190 = vcmask 195584
    %v192 = vsel %vm190, %v91, 0
    %v195 = vsel %vm190, %v92, 0
    %v198 = vsel %vm190, %v93, 0
    %v201 = vsel %vm190, %v94, 0
    %203 = vmatprep.subr.mxu0 0.0
    %204 = vmatpush1.msra.mxu0 %v182
    %205 = vmatprep.subr.mxu0 0.0
    %206 = vmatpush1.msra.mxu0 %v183
    %207 = vmatprep.subr.mxu0 0.0
    %208 = vmatpush1.msra.mxu0 %v184
    %209 = vmatprep.subr.mxu0 0.0
    %210 = vmatpush1.msra.mxu0 0.0
    %211 = vmatprep.subr.mxu0 0.0
    %212 = vmatpush1.msra.mxu0 0.0
    %213 = vmatprep.subr.mxu0 0.0
    %214 = vmatpush1.msra.mxu0 0.0
    %215 = vmatprep.subr.mxu0 0.0
    %216 = vmatpush1.msra.mxu0 0.0
    %217 = vmatprep.subr.mxu0 0.0
    %218 = vmatpush1.msra.mxu0 0.0
    %219 = vmatprep.subr.mxu0 0.0
    %220 = vmatpush1.msra.mxu0 0.0
    %221 = vmatprep.subr.mxu0 0.0
    %222 = vmatpush1.msra.mxu0 0.0
    %223 = vmatprep.subr.mxu0 0.0
    %224 = vmatpush1.msra.mxu0 0.0
    %225 = vmatprep.subr.mxu0 0.0
    %226 = vmatpush1.msra.mxu0 0.0
    %227 = vmatprep.subr.mxu0 0.0
    %228 = vmatpush1.msra.mxu0 0.0
    %229 = vmatprep.subr.mxu0 0.0
    %230 = vmatpush1.msra.mxu0 0.0
    %231 = vmatprep.subr.mxu0 0.0
    %232 = vmatpush1.msra.mxu0 0.0
    %233 = vmatprep.subr.mxu0 0.0
    %234 = vmatpush1.msra.mxu0 0.0
    %235 = vmatprep.subr.mxu0 0.0
    %236 = vmatpush1.msra.mxu0 0.0
    %237 = vmatprep.subr.mxu0 0.0
    %238 = vmatpush1.msra.mxu0 0.0
    %239 = vmatprep.subr.mxu0 0.0
    %240 = vmatpush1.msra.mxu0 0.0
    %241 = vmatprep.subr.mxu0 0.0
    %242 = vmatpush1.msra.mxu0 0.0
    %243 = vmatprep.subr.mxu0 0.0
    %244 = vmatpush1.msra.mxu0 0.0
    %245 = vmatprep.subr.mxu0 0.0
    %246 = vmatpush1.msra.mxu0 0.0
    %247 = vmatprep.subr.mxu0 0.0
    %248 = vmatpush1.msra.mxu0 0.0
    %249 = vmatprep.subr.mxu0 0.0
    %250 = vmatpush1.msra.mxu0 0.0
    %251 = vmatprep.subr.mxu0 0.0
    %252 = vmatpush1.msra.mxu0 0.0
    %253 = vmatprep.subr.mxu0 0.0
    %254 = vmatpush1.msra.mxu0 0.0
    %255 = vmatprep.subr.mxu0 0.0
    %256 = vmatpush1.msra.mxu0 0.0
    %257 = vmatprep.subr.mxu0 0.0
    %258 = vmatpush1.msra.mxu0 0.0
    %259 = vmatprep.subr.mxu0 0.0
    %260 = vmatpush1.msra.mxu0 0.0
    %261 = vmatprep.subr.mxu0 0.0
    %262 = vmatpush1.msra.mxu0 0.0
    %263 = vmatprep.subr.mxu0 0.0
    %264 = vmatpush1.msra.mxu0 0.0
    %265 = vmatprep.subr.mxu0 0.0
    %266 = vmatpush1.msra.mxu0 0.0
    %267 = vmatprep.mubr.f32.mxu0 0.0
    %268 = vmatmul.mubr.f32.gmra.mrb[0].mxu0 %v192
    %v269 = vpop.f32.mrb[0].mxu0
    %v270 = vadd.f32 %v189, %v269
    %v271 = vpop.f32.mrb[0].mxu0
    %272 = vmatprep.mubr.f32.mxu0 0.0
    %273 = vmatmul.mubr.f32.gmra.mrb[0].mxu0 %v195
    %v274 = vpop.f32.mrb[0].mxu0
    %v275 = vadd.f32 %v189, %v274
    %v276 = vpop.f32.mrb[0].mxu0
    %277 = vmatprep.mubr.f32.mxu0 0.0
    %278 = vmatmul.mubr.f32.gmra.mrb[0].mxu0 %v198
    %v279 = vpop.f32.mrb[0].mxu0
    %v280 = vadd.f32 %v189, %v279
    %v281 = vpop.f32.mrb[0].mxu0
    %282 = vmatprep.mubr.f32.mxu0 0.0
    %283 = vmatmul.mubr.f32.gmra.mrb[0].mxu0 %v201
    %v284 = vpop.f32.mrb[0].mxu0
    %v285 = vadd.f32 %v189, %v284
    %v286 = vpop.f32.mrb[0].mxu0
    %287 = vdwg.mxu0
    %v290 = vunpack.c.l.s4 1966171168
    %v291 = vunpack.c.0.s8 %v290
    %v292 = vlaneseq
    %v293 = vshrl.u32 %v292, 7
    %v294 = vsub.s32 %v291, %v293
    %v295 = vrot.slane %v179, %v294
    %v296 = vcombine.high %v295, %v295
    %v298 = vunpack.c.l.s4 1966171168
    %v299 = vunpack.c.0.s8 %v298
    %v300 = vlaneseq
    %v301 = vshrl.u32 %v300, 7
    %v302 = vsub.s32 %v299, %v301
    %v303 = vrot.slane %v295, %v302
    %v305 = vunpack.c.l.s4 1966171168
    %v306 = vunpack.c.0.s8 %v305
    %v307 = vlaneseq
    %v308 = vshrl.u32 %v307, 7
    %v309 = vsub.s32 %v306, %v308
    %v310 = vrot.slane %v296, %v309
    %v311 = vlaneseq
    %v312 = vshrl.u32 %v311, 7
    %v313 = vsub.s32 0, %v312
    %v314 = vrot.slane %v303, %v313
    %v315 = vlaneseq
    %v316 = vshrl.u32 %v315, 7
    %v317 = vsub.s32 0, %v316
    %v318 = vrot.slane %v310, %v317
    %v321 = vmul.f32 %v314, %v270
    %v322 = vmul.f32 %v314, %v275
    %v323 = vmul.f32 %v318, %v280
    %v324 = vmul.f32 %v318, %v285
    %325 = vadd.xlane.f32.xlu0 %v321
    %v326 = vpop.xlane.xlu0 %325
    %327 = vadd.xlane.f32.xlu0 %v322
    %v328 = vpop.xlane.xlu0 %327
    %329 = vadd.xlane.f32.xlu0 %v323
    %v330 = vpop.xlane.xlu0 %329
    %331 = vadd.xlane.f32.xlu0 %v324
    %v332 = vpop.xlane.xlu0 %331
    %v333 = vmax.f32 %v326, %v328
    %v334 = vrot.slane %v333, 4
    %v335 = vmax.f32 %v333, %v334
    %v336 = vrot.slane %v335, 2
    %v337 = vmax.f32 %v335, %v336
    %v338 = vrot.slane %v337, 1
    %v339 = vmax.f32 %v337, %v338
    %v340 = vmax.f32 %v330, %v332
    %v341 = vrot.slane %v340, 4
    %v342 = vmax.f32 %v340, %v341
    %v343 = vrot.slane %v342, 2
    %v344 = vmax.f32 %v342, %v343
    %v345 = vrot.slane %v344, 1
    %v346 = vmax.f32 %v344, %v345
    %v347 = vsub.f32 %v326, %v339
    %v348 = vsub.f32 %v328, %v339
    %v349 = vsub.f32 %v330, %v346
    %v350 = vsub.f32 %v332, %v346
    %v351 = vmul.f32 %v347, 1.442695
    %v352 = vpow.pop %v351
    %v353 = vmul.f32 %v348, 1.442695
    %v354 = vpow.pop %v353
    %v355 = vmul.f32 %v349, 1.442695
    %v356 = vpow.pop %v355
    %v357 = vmul.f32 %v350, 1.442695
    %v358 = vpow.pop %v357
    %v359 = vadd.f32 %v352, %v354
    %v360 = vrot.slane %v359, 4
    %v361 = vadd.f32 %v359, %v360
    %v362 = vrot.slane %v361, 2
    %v363 = vadd.f32 %v361, %v362
    %v364 = vrot.slane %v363, 1
    %v365 = vadd.f32 %v363, %v364
    %v366 = vadd.f32 %v356, %v358
    %v367 = vrot.slane %v366, 4
    %v368 = vadd.f32 %v366, %v367
    %v369 = vrot.slane %v368, 2
    %v370 = vadd.f32 %v368, %v369
    %v371 = vrot.slane %v370, 1
    %v372 = vadd.f32 %v370, %v371
    %v373 = vrcp.pop %v365
    %v374 = vmul.f32 %v352, %v373
    %v375 = vmul.f32 %v354, %v373
    %v376 = vrcp.pop %v372
    %v377 = vmul.f32 %v356, %v376
    %v378 = vmul.f32 %v358, %v376
    %v379 = vld [vmem:[#allocation10 + $0x48] sm:$0xff]
    %v380 = vld [vmem:[#allocation10 + $0x50] sm:$0xff]
    %v381 = vld [vmem:[#allocation10 + $0x58] sm:$0xff]
    %v382 = vld [vmem:[#allocation10 + $0x60] sm:$0xff]
    %v383 = vld [vmem:[#allocation10 + $0x68] sm:$0x1]
    %v384 = vlaneseq
    %v385 = vshrl.u32 %v384, 7
    %v386 = vsub.s32 0, %v385
    %v387 = vrot.slane %v383, %v386
    %388 = vmatprep.subr.mxu0 0.0
    %389 = vmatpush1.msra.mxu0 %v379
    %390 = vmatprep.subr.mxu0 0.0
    %391 = vmatpush1.msra.mxu0 %v380
    %392 = vmatprep.subr.mxu0 0.0
    %393 = vmatpush1.msra.mxu0 %v381
    %394 = vmatprep.subr.mxu0 0.0
    %395 = vmatpush1.msra.mxu0 %v382
    %396 = vmatprep.subr.mxu0 0.0
    %397 = vmatpush1.msra.mxu0 0.0
    %398 = vmatprep.subr.mxu0 0.0
    %399 = vmatpush1.msra.mxu0 0.0
    %400 = vmatprep.subr.mxu0 0.0
    %401 = vmatpush1.msra.mxu0 0.0
    %402 = vmatprep.subr.mxu0 0.0
    %403 = vmatpush1.msra.mxu0 0.0
    %404 = vmatprep.subr.mxu0 0.0
    %405 = vmatpush1.msra.mxu0 0.0
    %406 = vmatprep.subr.mxu0 0.0
    %407 = vmatpush1.msra.mxu0 0.0
    %408 = vmatprep.subr.mxu0 0.0
    %409 = vmatpush1.msra.mxu0 0.0
    %410 = vmatprep.subr.mxu0 0.0
    %411 = vmatpush1.msra.mxu0 0.0
    %412 = vmatprep.subr.mxu0 0.0
    %413 = vmatpush1.msra.mxu0 0.0
    %414 = vmatprep.subr.mxu0 0.0
    %415 = vmatpush1.msra.mxu0 0.0
    %416 = vmatprep.subr.mxu0 0.0
    %417 = vmatpush1.msra.mxu0 0.0
    %418 = vmatprep.subr.mxu0 0.0
    %419 = vmatpush1.msra.mxu0 0.0
    %420 = vmatprep.subr.mxu0 0.0
    %421 = vmatpush1.msra.mxu0 0.0
    %422 = vmatprep.subr.mxu0 0.0
    %423 = vmatpush1.msra.mxu0 0.0
    %424 = vmatprep.subr.mxu0 0.0
    %425 = vmatpush1.msra.mxu0 0.0
    %426 = vmatprep.subr.mxu0 0.0
    %427 = vmatpush1.msra.mxu0 0.0
    %428 = vmatprep.subr.mxu0 0.0
    %429 = vmatpush1.msra.mxu0 0.0
    %430 = vmatprep.subr.mxu0 0.0
    %431 = vmatpush1.msra.mxu0 0.0
    %432 = vmatprep.subr.mxu0 0.0
    %433 = vmatpush1.msra.mxu0 0.0
    %434 = vmatprep.subr.mxu0 0.0
    %435 = vmatpush1.msra.mxu0 0.0
    %436 = vmatprep.subr.mxu0 0.0
    %437 = vmatpush1.msra.mxu0 0.0
    %438 = vmatprep.subr.mxu0 0.0
    %439 = vmatpush1.msra.mxu0 0.0
    %440 = vmatprep.subr.mxu0 0.0
    %441 = vmatpush1.msra.mxu0 0.0
    %442 = vmatprep.subr.mxu0 0.0
    %443 = vmatpush1.msra.mxu0 0.0
    %444 = vmatprep.subr.mxu0 0.0
    %445 = vmatpush1.msra.mxu0 0.0
    %446 = vmatprep.subr.mxu0 0.0
    %447 = vmatpush1.msra.mxu0 0.0
    %448 = vmatprep.subr.mxu0 0.0
    %449 = vmatpush1.msra.mxu0 0.0
    %450 = vmatprep.subr.mxu0 0.0
    %451 = vmatpush1.msra.mxu0 0.0
    %452 = vmatprep.mubr.f32.mxu0 0.0
    %453 = vmatmul.mubr.f32.gmra.mrb[0].mxu0 %v110
    %v454 = vpop.f32.mrb[0].mxu0
    %v455 = vadd.f32 %v387, %v454
    %v456 = vpop.f32.mrb[0].mxu0
    %457 = vdwg.mxu0
    %v458 = vld [vmem:[#allocation10 + $0x70] sm:$0xff]
    %v459 = vld [vmem:[#allocation10 + $0x78] sm:$0xff]
    %v460 = vld [vmem:[#allocation10 + $0x80] sm:$0xff]
    %v461 = vld [vmem:[#allocation10 + $0x88] sm:$0xff]
    %v462 = vld [vmem:[#allocation10 + $0x90] sm:$0x1]
    %v463 = vlaneseq
    %v464 = vshrl.u32 %v463, 7
    %v465 = vsub.s32 0, %v464
    %v466 = vrot.slane %v462, %v465
    %467 = vmatprep.subr.mxu0 0.0
    %468 = vmatpush1.msra.mxu0 %v458
    %469 = vmatprep.subr.mxu0 0.0
    %470 = vmatpush1.msra.mxu0 %v459
    %471 = vmatprep.subr.mxu0 0.0
    %472 = vmatpush1.msra.mxu0 %v460
    %473 = vmatprep.subr.mxu0 0.0
    %474 = vmatpush1.msra.mxu0 %v461
    %475 = vmatprep.subr.mxu0 0.0
    %476 = vmatpush1.msra.mxu0 0.0
    %477 = vmatprep.subr.mxu0 0.0
    %478 = vmatpush1.msra.mxu0 0.0
    %479 = vmatprep.subr.mxu0 0.0
    %480 = vmatpush1.msra.mxu0 0.0
    %481 = vmatprep.subr.mxu0 0.0
    %482 = vmatpush1.msra.mxu0 0.0
    %483 = vmatprep.subr.mxu0 0.0
    %484 = vmatpush1.msra.mxu0 0.0
    %485 = vmatprep.subr.mxu0 0.0
    %486 = vmatpush1.msra.mxu0 0.0
    %487 = vmatprep.subr.mxu0 0.0
    %488 = vmatpush1.msra.mxu0 0.0
    %489 = vmatprep.subr.mxu0 0.0
    %490 = vmatpush1.msra.mxu0 0.0
    %491 = vmatprep.subr.mxu0 0.0
    %492 = vmatpush1.msra.mxu0 0.0
    %493 = vmatprep.subr.mxu0 0.0
    %494 = vmatpush1.msra.mxu0 0.0
    %495 = vmatprep.subr.mxu0 0.0
    %496 = vmatpush1.msra.mxu0 0.0
    %497 = vmatprep.subr.mxu0 0.0
    %498 = vmatpush1.msra.mxu0 0.0
    %499 = vmatprep.subr.mxu0 0.0
    %500 = vmatpush1.msra.mxu0 0.0
    %501 = vmatprep.subr.mxu0 0.0
    %502 = vmatpush1.msra.mxu0 0.0
    %503 = vmatprep.subr.mxu0 0.0
    %504 = vmatpush1.msra.mxu0 0.0
    %505 = vmatprep.subr.mxu0 0.0
    %506 = vmatpush1.msra.mxu0 0.0
    %507 = vmatprep.subr.mxu0 0.0
    %508 = vmatpush1.msra.mxu0 0.0
    %509 = vmatprep.subr.mxu0 0.0
    %510 = vmatpush1.msra.mxu0 0.0
    %511 = vmatprep.subr.mxu0 0.0
    %512 = vmatpush1.msra.mxu0 0.0
    %513 = vmatprep.subr.mxu0 0.0
    %514 = vmatpush1.msra.mxu0 0.0
    %515 = vmatprep.subr.mxu0 0.0
    %516 = vmatpush1.msra.mxu0 0.0
    %517 = vmatprep.subr.mxu0 0.0
    %518 = vmatpush1.msra.mxu0 0.0
    %519 = vmatprep.subr.mxu0 0.0
    %520 = vmatpush1.msra.mxu0 0.0
    %521 = vmatprep.subr.mxu0 0.0
    %522 = vmatpush1.msra.mxu0 0.0
    %523 = vmatprep.subr.mxu0 0.0
    %524 = vmatpush1.msra.mxu0 0.0
    %525 = vmatprep.subr.mxu0 0.0
    %526 = vmatpush1.msra.mxu0 0.0
    %527 = vmatprep.subr.mxu0 0.0
    %528 = vmatpush1.msra.mxu0 0.0
    %529 = vmatprep.subr.mxu0 0.0
    %530 = vmatpush1.msra.mxu0 0.0
    %531 = vmatprep.mubr.f32.mxu0 0.0
    %532 = vmatmul.mubr.f32.gmra.mrb[0].mxu0 %v110
    %v533 = vpop.f32.mrb[0].mxu0
    %v534 = vadd.f32 %v466, %v533
    %v535 = vpop.f32.mrb[0].mxu0
    %536 = vdwg.mxu0
    %v539 = vunpack.c.l.s4 1966171168
    %v540 = vunpack.c.0.s8 %v539
    %v541 = vlaneseq
    %v542 = vshrl.u32 %v541, 7
    %v543 = vsub.s32 %v540, %v542
    %v544 = vrot.slane %v455, %v543
    %v545 = vcombine.high %v544, %v544
    %v547 = vunpack.c.l.s4 1966171168
    %v548 = vunpack.c.0.s8 %v547
    %v549 = vlaneseq
    %v550 = vshrl.u32 %v549, 7
    %v551 = vsub.s32 %v548, %v550
    %v552 = vrot.slane %v544, %v551
    %v554 = vunpack.c.l.s4 1966171168
    %v555 = vunpack.c.0.s8 %v554
    %v556 = vlaneseq
    %v557 = vshrl.u32 %v556, 7
    %v558 = vsub.s32 %v555, %v557
    %v559 = vrot.slane %v545, %v558
    %v560 = vlaneseq
    %v561 = vshrl.u32 %v560, 7
    %v562 = vsub.s32 0, %v561
    %v563 = vrot.slane %v552, %v562
    %v564 = vlaneseq
    %v565 = vshrl.u32 %v564, 7
    %v566 = vsub.s32 0, %v565
    %v567 = vrot.slane %v559, %v566
    %v570 = vmul.f32 %v374, %v563
    %v571 = vmul.f32 %v375, %v563
    %v572 = vmul.f32 %v377, %v567
    %v573 = vmul.f32 %v378, %v567
    %v574 = vadd.f32 %v91, %v570
    %v575 = vadd.f32 %v92, %v571
    %v576 = vadd.f32 %v93, %v572
    %v577 = vadd.f32 %v94, %v573
    %v580 = vunpack.c.l.s4 1966171168
    %v581 = vunpack.c.0.s8 %v580
    %v582 = vlaneseq
    %v583 = vshrl.u32 %v582, 7
    %v584 = vsub.s32 %v581, %v583
    %v585 = vrot.slane %v534, %v584
    %v586 = vcombine.high %v585, %v585
    %v588 = vunpack.c.l.s4 1966171168
    %v589 = vunpack.c.0.s8 %v588
    %v590 = vlaneseq
    %v591 = vshrl.u32 %v590, 7
    %v592 = vsub.s32 %v589, %v591
    %v593 = vrot.slane %v585, %v592
    %v595 = vunpack.c.l.s4 1966171168
    %v596 = vunpack.c.0.s8 %v595
    %v597 = vlaneseq
    %v598 = vshrl.u32 %v597, 7
    %v599 = vsub.s32 %v596, %v598
    %v600 = vrot.slane %v586, %v599
    %v601 = vlaneseq
    %v602 = vshrl.u32 %v601, 7
    %v603 = vsub.s32 0, %v602
    %v604 = vrot.slane %v593, %v603
    %v605 = vlaneseq
    %v606 = vshrl.u32 %v605, 7
    %v607 = vsub.s32 0, %v606
    %v608 = vrot.slane %v600, %v607
    %v611 = vmul.f32 %v374, %v604
    %v612 = vmul.f32 %v375, %v604
    %v613 = vmul.f32 %v377, %v608
    %v614 = vmul.f32 %v378, %v608
    %v615 = vadd.f32 %v95, %v611
    %v616 = vadd.f32 %v96, %v612
    %v617 = vadd.f32 %v97, %v613
    %v618 = vadd.f32 %v98, %v614
    %v619 = vld [vmem:[#allocation10 + $0x98] sm:$0xff]
    %v620 = vld [vmem:[#allocation10 + $0xa0] sm:$0xff]
    %v621 = vld [vmem:[#allocation10 + $0xa8] sm:$0x1]
    %v622 = vlaneseq
    %v623 = vshrl.u32 %v622, 7
    %v624 = vsub.s32 0, %v623
    %v625 = vrot.slane %v621, %v624
    %vm626 = vcmask 130048
    %v628 = vsel %vm626, %v90, 0
    %630 = vmatprep.subr.mxu0 0.0
    %631 = vmatpush1.msra.mxu0 %v619
    %632 = vmatprep.subr.mxu0 0.0
    %633 = vmatpush1.msra.mxu0 %v620
    %634 = vmatprep.subr.mxu0 0.0
    %635 = vmatpush1.msra.mxu0 0.0
    %636 = vmatprep.subr.mxu0 0.0
    %637 = vmatpush1.msra.mxu0 0.0
    %638 = vmatprep.subr.mxu0 0.0
    %639 = vmatpush1.msra.mxu0 0.0
    %640 = vmatprep.subr.mxu0 0.0
    %641 = vmatpush1.msra.mxu0 0.0
    %642 = vmatprep.subr.mxu0 0.0
    %643 = vmatpush1.msra.mxu0 0.0
    %644 = vmatprep.subr.mxu0 0.0
    %645 = vmatpush1.msra.mxu0 0.0
    %646 = vmatprep.subr.mxu0 0.0
    %647 = vmatpush1.msra.mxu0 0.0
    %648 = vmatprep.subr.mxu0 0.0
    %649 = vmatpush1.msra.mxu0 0.0
    %650 = vmatprep.subr.mxu0 0.0
    %651 = vmatpush1.msra.mxu0 0.0
    %652 = vmatprep.subr.mxu0 0.0
    %653 = vmatpush1.msra.mxu0 0.0
    %654 = vmatprep.subr.mxu0 0.0
    %655 = vmatpush1.msra.mxu0 0.0
    %656 = vmatprep.subr.mxu0 0.0
    %657 = vmatpush1.msra.mxu0 0.0
    %658 = vmatprep.subr.mxu0 0.0
    %659 = vmatpush1.msra.mxu0 0.0
    %660 = vmatprep.subr.mxu0 0.0
    %661 = vmatpush1.msra.mxu0 0.0
    %662 = vmatprep.subr.mxu0 0.0
    %663 = vmatpush1.msra.mxu0 0.0
    %664 = vmatprep.subr.mxu0 0.0
    %665 = vmatpush1.msra.mxu0 0.0
    %666 = vmatprep.subr.mxu0 0.0
    %667 = vmatpush1.msra.mxu0 0.0
    %668 = vmatprep.subr.mxu0 0.0
    %669 = vmatpush1.msra.mxu0 0.0
    %670 = vmatprep.subr.mxu0 0.0
    %671 = vmatpush1.msra.mxu0 0.0
    %672 = vmatprep.subr.mxu0 0.0
    %673 = vmatpush1.msra.mxu0 0.0
    %674 = vmatprep.subr.mxu0 0.0
    %675 = vmatpush1.msra.mxu0 0.0
    %676 = vmatprep.subr.mxu0 0.0
    %677 = vmatpush1.msra.mxu0 0.0
    %678 = vmatprep.subr.mxu0 0.0
    %679 = vmatpush1.msra.mxu0 0.0
    %680 = vmatprep.subr.mxu0 0.0
    %681 = vmatpush1.msra.mxu0 0.0
    %682 = vmatprep.subr.mxu0 0.0
    %683 = vmatpush1.msra.mxu0 0.0
    %684 = vmatprep.subr.mxu0 0.0
    %685 = vmatpush1.msra.mxu0 0.0
    %686 = vmatprep.subr.mxu0 0.0
    %687 = vmatpush1.msra.mxu0 0.0
    %688 = vmatprep.subr.mxu0 0.0
    %689 = vmatpush1.msra.mxu0 0.0
    %690 = vmatprep.subr.mxu0 0.0
    %691 = vmatpush1.msra.mxu0 0.0
    %692 = vmatprep.subr.mxu0 0.0
    %693 = vmatpush1.msra.mxu0 0.0
    %694 = vmatprep.mubr.f32.mxu0 0.0
    %695 = vmatmul.mubr.f32.gmra.mrb[0].mxu0 %v628
    %v696 = vpop.f32.mrb[0].mxu0
    %v697 = vadd.f32 %v625, %v696
    %v698 = vpop.f32.mrb[0].mxu0
    %699 = vdwg.mxu0
    %v700 = vld [vmem:[#allocation10 + $0xb0] sm:$0xff]
    %v701 = vld [vmem:[#allocation10 + $0xb8] sm:$0xff]
    %v702 = vld [vmem:[#allocation10 + $0xc0] sm:$0xff]
    %v703 = vld [vmem:[#allocation10 + $0xc8] sm:$0x1]
    %v704 = vlaneseq
    %v705 = vshrl.u32 %v704, 7
    %v706 = vsub.s32 0, %v705
    %v707 = vrot.slane %v703, %v706
    %v709 = vsel %vm190, %v574, 0
    %v712 = vsel %vm190, %v575, 0
    %v715 = vsel %vm190, %v576, 0
    %v718 = vsel %vm190, %v577, 0
    %720 = vmatprep.subr.mxu0 0.0
    %721 = vmatpush1.msra.mxu0 %v700
    %722 = vmatprep.subr.mxu0 0.0
    %723 = vmatpush1.msra.mxu0 %v701
    %724 = vmatprep.subr.mxu0 0.0
    %725 = vmatpush1.msra.mxu0 %v702
    %726 = vmatprep.subr.mxu0 0.0
    %727 = vmatpush1.msra.mxu0 0.0
    %728 = vmatprep.subr.mxu0 0.0
    %729 = vmatpush1.msra.mxu0 0.0
    %730 = vmatprep.subr.mxu0 0.0
    %731 = vmatpush1.msra.mxu0 0.0
    %732 = vmatprep.subr.mxu0 0.0
    %733 = vmatpush1.msra.mxu0 0.0
    %734 = vmatprep.subr.mxu0 0.0
    %735 = vmatpush1.msra.mxu0 0.0
    %736 = vmatprep.subr.mxu0 0.0
    %737 = vmatpush1.msra.mxu0 0.0
    %738 = vmatprep.subr.mxu0 0.0
    %739 = vmatpush1.msra.mxu0 0.0
    %740 = vmatprep.subr.mxu0 0.0
    %741 = vmatpush1.msra.mxu0 0.0
    %742 = vmatprep.subr.mxu0 0.0
    %743 = vmatpush1.msra.mxu0 0.0
    %744 = vmatprep.subr.mxu0 0.0
    %745 = vmatpush1.msra.mxu0 0.0
    %746 = vmatprep.subr.mxu0 0.0
    %747 = vmatpush1.msra.mxu0 0.0
    %748 = vmatprep.subr.mxu0 0.0
    %749 = vmatpush1.msra.mxu0 0.0
    %750 = vmatprep.subr.mxu0 0.0
    %751 = vmatpush1.msra.mxu0 0.0
    %752 = vmatprep.subr.mxu0 0.0
    %753 = vmatpush1.msra.mxu0 0.0
    %754 = vmatprep.subr.mxu0 0.0
    %755 = vmatpush1.msra.mxu0 0.0
    %756 = vmatprep.subr.mxu0 0.0
    %757 = vmatpush1.msra.mxu0 0.0
    %758 = vmatprep.subr.mxu0 0.0
    %759 = vmatpush1.msra.mxu0 0.0
    %760 = vmatprep.subr.mxu0 0.0
    %761 = vmatpush1.msra.mxu0 0.0
    %762 = vmatprep.subr.mxu0 0.0
    %763 = vmatpush1.msra.mxu0 0.0
    %764 = vmatprep.subr.mxu0 0.0
    %765 = vmatpush1.msra.mxu0 0.0
    %766 = vmatprep.subr.mxu0 0.0
    %767 = vmatpush1.msra.mxu0 0.0
    %768 = vmatprep.subr.mxu0 0.0
    %769 = vmatpush1.msra.mxu0 0.0
    %770 = vmatprep.subr.mxu0 0.0
    %771 = vmatpush1.msra.mxu0 0.0
    %772 = vmatprep.subr.mxu0 0.0
    %773 = vmatpush1.msra.mxu0 0.0
    %774 = vmatprep.subr.mxu0 0.0
    %775 = vmatpush1.msra.mxu0 0.0
    %776 = vmatprep.subr.mxu0 0.0
    %777 = vmatpush1.msra.mxu0 0.0
    %778 = vmatprep.subr.mxu0 0.0
    %779 = vmatpush1.msra.mxu0 0.0
    %780 = vmatprep.subr.mxu0 0.0
    %781 = vmatpush1.msra.mxu0 0.0
    %782 = vmatprep.subr.mxu0 0.0
    %783 = vmatpush1.msra.mxu0 0.0
    %784 = vmatprep.mubr.f32.mxu0 0.0
    %785 = vmatmul.mubr.f32.gmra.mrb[0].mxu0 %v709
    %v786 = vpop.f32.mrb[0].mxu0
    %v787 = vadd.f32 %v707, %v786
    %v788 = vpop.f32.mrb[0].mxu0
    %789 = vmatprep.mubr.f32.mxu0 0.0
    %790 = vmatmul.mubr.f32.gmra.mrb[0].mxu0 %v712
    %v791 = vpop.f32.mrb[0].mxu0
    %v792 = vadd.f32 %v707, %v791
    %v793 = vpop.f32.mrb[0].mxu0
    %794 = vmatprep.mubr.f32.mxu0 0.0
    %795 = vmatmul.mubr.f32.gmra.mrb[0].mxu0 %v715
    %v796 = vpop.f32.mrb[0].mxu0
    %v797 = vadd.f32 %v707, %v796
    %v798 = vpop.f32.mrb[0].mxu0
    %799 = vmatprep.mubr.f32.mxu0 0.0
    %800 = vmatmul.mubr.f32.gmra.mrb[0].mxu0 %v718
    %v801 = vpop.f32.mrb[0].mxu0
    %v802 = vadd.f32 %v707, %v801
    %v803 = vpop.f32.mrb[0].mxu0
    %804 = vdwg.mxu0
    %v807 = vunpack.c.l.s4 1966171168
    %v808 = vunpack.c.0.s8 %v807
    %v809 = vlaneseq
    %v810 = vshrl.u32 %v809, 7
    %v811 = vsub.s32 %v808, %v810
    %v812 = vrot.slane %v697, %v811
    %v813 = vcombine.high %v812, %v812
    %v815 = vunpack.c.l.s4 1966171168
    %v816 = vunpack.c.0.s8 %v815
    %v817 = vlaneseq
    %v818 = vshrl.u32 %v817, 7
    %v819 = vsub.s32 %v816, %v818
    %v820 = vrot.slane %v812, %v819
    %v822 = vunpack.c.l.s4 1966171168
    %v823 = vunpack.c.0.s8 %v822
    %v824 = vlaneseq
    %v825 = vshrl.u32 %v824, 7
    %v826 = vsub.s32 %v823, %v825
    %v827 = vrot.slane %v813, %v826
    %v828 = vlaneseq
    %v829 = vshrl.u32 %v828, 7
    %v830 = vsub.s32 0, %v829
    %v831 = vrot.slane %v820, %v830
    %v832 = vlaneseq
    %v833 = vshrl.u32 %v832, 7
    %v834 = vsub.s32 0, %v833
    %v835 = vrot.slane %v827, %v834
    %v838 = vmul.f32 %v831, %v787
    %v839 = vmul.f32 %v831, %v792
    %v840 = vmul.f32 %v835, %v797
    %v841 = vmul.f32 %v835, %v802
    %842 = vadd.xlane.f32.xlu0 %v838
    %v843 = vpop.xlane.xlu0 %842
    %844 = vadd.xlane.f32.xlu0 %v839
    %v845 = vpop.xlane.xlu0 %844
    %846 = vadd.xlane.f32.xlu0 %v840
    %v847 = vpop.xlane.xlu0 %846
    %848 = vadd.xlane.f32.xlu0 %v841
    %v849 = vpop.xlane.xlu0 %848
    %v850 = vmax.f32 %v843, %v845
    %v851 = vrot.slane %v850, 4
    %v852 = vmax.f32 %v850, %v851
    %v853 = vrot.slane %v852, 2
    %v854 = vmax.f32 %v852, %v853
    %v855 = vrot.slane %v854, 1
    %v856 = vmax.f32 %v854, %v855
    %v857 = vmax.f32 %v847, %v849
    %v858 = vrot.slane %v857, 4
    %v859 = vmax.f32 %v857, %v858
    %v860 = vrot.slane %v859, 2
    %v861 = vmax.f32 %v859, %v860
    %v862 = vrot.slane %v861, 1
    %v863 = vmax.f32 %v861, %v862
    %v864 = vsub.f32 %v843, %v856
    %v865 = vsub.f32 %v845, %v856
    %v866 = vsub.f32 %v847, %v863
    %v867 = vsub.f32 %v849, %v863
    %v868 = vmul.f32 %v864, 1.442695
    %v869 = vpow.pop %v868
    %v870 = vmul.f32 %v865, 1.442695
    %v871 = vpow.pop %v870
    %v872 = vmul.f32 %v866, 1.442695
    %v873 = vpow.pop %v872
    %v874 = vmul.f32 %v867, 1.442695
    %v875 = vpow.pop %v874
    %v876 = vadd.f32 %v869, %v871
    %v877 = vrot.slane %v876, 4
    %v878 = vadd.f32 %v876, %v877
    %v879 = vrot.slane %v878, 2
    %v880 = vadd.f32 %v878, %v879
    %v881 = vrot.slane %v880, 1
    %v882 = vadd.f32 %v880, %v881
    %v883 = vadd.f32 %v873, %v875
    %v884 = vrot.slane %v883, 4
    %v885 = vadd.f32 %v883, %v884
    %v886 = vrot.slane %v885, 2
    %v887 = vadd.f32 %v885, %v886
    %v888 = vrot.slane %v887, 1
    %v889 = vadd.f32 %v887, %v888
    %v890 = vrcp.pop %v882
    %v891 = vmul.f32 %v869, %v890
    %v892 = vmul.f32 %v871, %v890
    %v893 = vrcp.pop %v889
    %v894 = vmul.f32 %v873, %v893
    %v895 = vmul.f32 %v875, %v893
    %v896 = vmul.f32 %v891, %v615
    %v897 = vmul.f32 %v892, %v616
    %v898 = vmul.f32 %v894, %v617
    %v899 = vmul.f32 %v895, %v618
    %vm900 = vcmask 326656
    %v901 = vsel %vm900, %v896, 0.0
    %v902 = vsel %vm900, %v897, 0.0
    %v903 = vadd.f32 %v901, %v902
    %v904 = vrot.slane %v903, 4
    %v905 = vadd.f32 %v903, %v904
    %v906 = vrot.slane %v905, 2
    %v907 = vadd.f32 %v905, %v906
    %v908 = vrot.slane %v907, 1
    %v909 = vadd.f32 %v907, %v908
    %v910 = vsel %vm900, %v898, 0.0
    %v911 = vsel %vm900, %v899, 0.0
    %v912 = vadd.f32 %v910, %v911
    %v913 = vrot.slane %v912, 4
    %v914 = vadd.f32 %v912, %v913
    %v915 = vrot.slane %v914, 2
    %v916 = vadd.f32 %v914, %v915
    %v917 = vrot.slane %v916, 1
    %v918 = vadd.f32 %v916, %v917
    %v919 = vld [vmem:[#allocation10 + $0xd0] sm:$0xff]
    %v920 = vld [vmem:[#allocation10 + $0xd8] sm:$0xff]
    %v921 = vld [vmem:[#allocation10 + $0xe0] sm:$0xff]
    %v922 = vld [vmem:[#allocation10 + $0xe8] sm:$0xff]
    %v923 = vld [vmem:[#allocation10 + $0xf0] sm:$0xff]
    %v924 = vld [vmem:[#allocation10 + $0xf8] sm:$0x1]
    %v925 = vlaneseq
    %v926 = vshrl.u32 %v925, 7
    %v927 = vsub.s32 0, %v926
    %v928 = vrot.slane %v924, %v927
    %vm931 = vcmask 1041409
    %v932 = vsel %vm931, %v918, %v909
    %v933 = vsel %vm900, %v932, 0
    %935 = vmatprep.subr.mxu0 0.0
    %936 = vmatpush1.msra.mxu0 %v919
    %937 = vmatprep.subr.mxu0 0.0
    %938 = vmatpush1.msra.mxu0 %v920
    %939 = vmatprep.subr.mxu0 0.0
    %940 = vmatpush1.msra.mxu0 %v921
    %941 = vmatprep.subr.mxu0 0.0
    %942 = vmatpush1.msra.mxu0 %v922
    %943 = vmatprep.subr.mxu0 0.0
    %944 = vmatpush1.msra.mxu0 %v923
    %945 = vmatprep.subr.mxu0 0.0
    %946 = vmatpush1.msra.mxu0 0.0
    %947 = vmatprep.subr.mxu0 0.0
    %948 = vmatpush1.msra.mxu0 0.0
    %949 = vmatprep.subr.mxu0 0.0
    %950 = vmatpush1.msra.mxu0 0.0
    %951 = vmatprep.subr.mxu0 0.0
    %952 = vmatpush1.msra.mxu0 0.0
    %953 = vmatprep.subr.mxu0 0.0
    %954 = vmatpush1.msra.mxu0 0.0
    %955 = vmatprep.subr.mxu0 0.0
    %956 = vmatpush1.msra.mxu0 0.0
    %957 = vmatprep.subr.mxu0 0.0
    %958 = vmatpush1.msra.mxu0 0.0
    %959 = vmatprep.subr.mxu0 0.0
    %960 = vmatpush1.msra.mxu0 0.0
    %961 = vmatprep.subr.mxu0 0.0
    %962 = vmatpush1.msra.mxu0 0.0
    %963 = vmatprep.subr.mxu0 0.0
    %964 = vmatpush1.msra.mxu0 0.0
    %965 = vmatprep.subr.mxu0 0.0
    %966 = vmatpush1.msra.mxu0 0.0
    %967 = vmatprep.subr.mxu0 0.0
    %968 = vmatpush1.msra.mxu0 0.0
    %969 = vmatprep.subr.mxu0 0.0
    %970 = vmatpush1.msra.mxu0 0.0
    %971 = vmatprep.subr.mxu0 0.0
    %972 = vmatpush1.msra.mxu0 0.0
    %973 = vmatprep.subr.mxu0 0.0
    %974 = vmatpush1.msra.mxu0 0.0
    %975 = vmatprep.subr.mxu0 0.0
    %976 = vmatpush1.msra.mxu0 0.0
    %977 = vmatprep.subr.mxu0 0.0
    %978 = vmatpush1.msra.mxu0 0.0
    %979 = vmatprep.subr.mxu0 0.0
    %980 = vmatpush1.msra.mxu0 0.0
    %981 = vmatprep.subr.mxu0 0.0
    %982 = vmatpush1.msra.mxu0 0.0
    %983 = vmatprep.subr.mxu0 0.0
    %984 = vmatpush1.msra.mxu0 0.0
    %985 = vmatprep.subr.mxu0 0.0
    %986 = vmatpush1.msra.mxu0 0.0
    %987 = vmatprep.subr.mxu0 0.0
    %988 = vmatpush1.msra.mxu0 0.0
    %989 = vmatprep.subr.mxu0 0.0
    %990 = vmatpush1.msra.mxu0 0.0
    %991 = vmatprep.subr.mxu0 0.0
    %992 = vmatpush1.msra.mxu0 0.0
    %993 = vmatprep.subr.mxu0 0.0
    %994 = vmatpush1.msra.mxu0 0.0
    %995 = vmatprep.subr.mxu0 0.0
    %996 = vmatpush1.msra.mxu0 0.0
    %997 = vmatprep.subr.mxu0 0.0
    %998 = vmatpush1.msra.mxu0 0.0
    %999 = vmatprep.mubr.f32.mxu0 0.0
    %1000 = vmatmul.mubr.f32.gmra.mrb[0].mxu0 %v933
    %v1001 = vpop.f32.mrb[0].mxu0
    %v1002 = vadd.f32 %v928, %v1001
    %v1003 = vpop.f32.mrb[0].mxu0
    %1004 = vdwg.mxu0
    %vm1005 = vcmask 58368
    %1006 = vst.msk [vmem:[#allocation11] sm:$0x3] %vm1005, %v1002
    %1007 = vst.msk [vmem:[#allocation12] sm:$0xff] %vm190, %v574
    %1008 = vst.msk [vmem:[#allocation12 + $0x8] sm:$0xff] %vm190, %v575
    %1009 = vst.msk [vmem:[#allocation12 + $0x10] sm:$0xff] %vm190, %v576
    %1010 = vst.msk [vmem:[#allocation12 + $0x18] sm:$0xff] %vm190, %v577
    %1011 = vst.msk [vmem:[#allocation14] sm:$0xff] %vm900, %v615
    %1012 = vst.msk [vmem:[#allocation14 + $0x8] sm:$0xff] %vm900, %v616
    %1013 = vst.msk [vmem:[#allocation14 + $0x10] sm:$0xff] %vm900, %v617
    %1014 = vst.msk [vmem:[#allocation14 + $0x18] sm:$0xff] %vm900, %v618
    // Predicated region
    $region42: #{kv_memory_forward.1} parent=1 // pred_check
      _
    $region43: #{kv_memory_forward.1} parent=1 // pred_check_branch
      %1016 = sbr.rel (0) target = $region45
    $region44: #{kv_memory_forward.1} parent=1 // pred_region
      %s1018 = ssub.s32 32, 32
      %1019 = vsyncadd [#allocation4], %s1018
      %s1021 = sshll.u32 [#allocation11], 4
      %s1022 = int_to_ptr.vmem [resolvable:$true] %s1021
      %1024 = dma.vmem_to_hbm [thread:$0]  %s1022, 32, %s5, [#allocation4]
    $region45: #{kv_memory_forward.1} parent=1 // pred_fallthru
      _
    // Predicated region
    $region46: #{kv_memory_forward.1} parent=1 // pred_check
      _
    $region47: #{kv_memory_forward.1} parent=1 // pred_check_branch
      %1026 = sbr.rel (0) target = $region49
    $region48: #{kv_memory_forward.1} parent=1 // pred_region
      %s1028 = ssub.s32 512, 512
      %1029 = vsyncadd [#allocation13], %s1028
      %s1030 = sshll.u32 [#allocation12], 4
      %s1031 = int_to_ptr.vmem [resolvable:$true] %s1030
      %1036 = dma.vmem_to_hbm [thread:$0]  %s1031, 512, %s6, [#allocation13], 128, 128, 8
    $region49: #{kv_memory_forward.1} parent=1 // pred_fallthru
      _
    // Predicated region
    $region50: #{kv_memory_forward.1} parent=1 // pred_check
      _
    $region51: #{kv_memory_forward.1} parent=1 // pred_check_branch
      %1038 = sbr.rel (0) target = $region53
    $region52: #{kv_memory_forward.1} parent=1 // pred_region
      %s1040 = ssub.s32 512, 512
      %1041 = vsyncadd [#allocation13], %s1040
      %s1042 = sshll.u32 [#allocation14], 4
      %s1043 = int_to_ptr.vmem [resolvable:$true] %s1042
      %1048 = dma.vmem_to_hbm [thread:$0]  %s1043, 512, %s7, [#allocation13], 128, 128, 8
    $region53: #{kv_memory_forward.1} parent=1 // pred_fallthru
      _
    // Predicated region
    $region54: #{kv_memory_forward.1} parent=1 // pred_check
      _
    $region55: #{kv_memory_forward.1} parent=1 // pred_check_branch
      %1050 = sbr.rel (0) target = $region57
    $region56: #{kv_memory_forward.1} parent=1 // pred_region
      %1051 = dma.done [#allocation4], 32
    $region57: #{kv_memory_forward.1} parent=1 // pred_fallthru
      _
    // Predicated region
    $region58: #{kv_memory_forward.1} parent=1 // pred_check
      _
    $region59: #{kv_memory_forward.1} parent=1 // pred_check_branch
      %1053 = sbr.rel (0) target = $region61
    $region60: #{kv_memory_forward.1} parent=1 // pred_region
      %1054 = dma.done [#allocation13], 512
    $region61: #{kv_memory_forward.1} parent=1 // pred_fallthru
      _
    // Predicated region
    $region62: #{kv_memory_forward.1} parent=1 // pred_check
      _
    $region63: #{kv_memory_forward.1} parent=1 // pred_check_branch
      %1056 = sbr.rel (0) target = $region65
    $region64: #{kv_memory_forward.1} parent=1 // pred_region
      %1057 = dma.done [#allocation13], 512
    $region65: #{kv_memory_forward.1} parent=1 // pred_fallthru
      _
    %1058 = vsyncpa [#allocation3], 1
    %1059 = vsyncpa [#allocation6], 1
    %1060 = vsyncpa [#allocation9], 1
    %1061 = vsyncpa [#allocation4], 1
    %1062 = vsyncpa [#allocation13], 1

</llo_original>
